<compile_context>
chip_gen: v7x
topology: tpu7x:2x2x1
jax: 0.10.0
libtpu: 0.0.40
codegen_flags: <defaults>
</compile_context>

<pallas_src>
import jax
import jax.numpy as jnp
from jax.experimental import pallas as pl
from jax.experimental.pallas import tpu as pltpu


def _pick_hw_tile(hw, max_hw_tile):
    """Largest multiple-of-128 divisor of hw that is <= max_hw_tile."""
    if hw % 128 != 0:
        # Fallback: one full-width tile.  Correct, but the scratch becomes
        # (HDIM, HW) f32 and lane stores are masked -- real crops are 224x224.
        return hw
    start = max(128, min((max_hw_tile // 128) * 128, hw))
    for cand in range(start, 127, -128):
        if hw % cand == 0:
            return cand
    return hw


def quality_classifier(x_bchw_u8, mean, std, w1, b1, w2, b2, *,
                       max_hw_tile=12544, max_batch_tile=8):
    """x_bchw_u8: (B, C, H, W) uint8 raw pixel values in [0, 255] (channels
    first, i.e. the layout ToTensor would produce before scaling).
    Returns predicted class per image, shape (B,), float32 in {0., 1.}."""
    B, C, H, W = x_bchw_u8.shape
    HW = H * W
    HDIM = w1.shape[1]

    # --- spatial tiling ------------------------------------------------------
    hw_tile = _pick_hw_tile(HW, max_hw_tile)        # 224x224 -> 12544, 4 steps
    k_steps = HW // hw_tile
    aligned = (hw_tile % 128 == 0)
    acc_lanes = 128 if aligned else hw_tile
    n128 = hw_tile // 128 if aligned else 1

    # --- batch tiling: amortize per-grid-step overhead for small images -------
    def vmem_estimate(bt):
        return (2 * bt * C * hw_tile                  # double-buffered u8 image tile
                + 2 * bt * HDIM * hw_tile * 4         # conv output h (+ headroom)
                + bt * HDIM * acc_lanes * 4           # accumulator scratch
                + 2 * bt * 128 * 4                    # output block
                + 2 * (HDIM * C + 2 * HDIM + 1) * 4)  # weights / biases

    bt = 1
    for cand in range(min(B, max_batch_tile), 0, -1):
        if B % cand == 0 and vmem_estimate(cand) <= (6 << 20):
            bt = cand
            break

    # Explicit but modest scoped-VMEM request (v5e default is 16 MiB).
    vmem_limit = int(min(max(vmem_estimate(bt) + (4 << 20), 16 << 20), 32 << 20))

    # --- fold ToTensor(/255) + Normalize(mean, std) into the conv weights -----
    w1 = w1.astype(jnp.float32)
    inv_std = (1.0 / std).astype(jnp.float32)                     # (C,)
    w1f = w1 * (inv_std / 255.0)[:, None]                         # (C, HDIM)
    b1f = b1.astype(jnp.float32) - (mean.astype(jnp.float32) * inv_std) @ w1

    w1t = w1f.T                                                   # (HDIM, C)
    b1c = b1f.reshape(HDIM, 1)                                    # (HDIM, 1)
    # Fold the 1/HW of the global-average-pool into the head weight.
    w2c = (w2.astype(jnp.float32) / float(HW)).reshape(HDIM, 1)   # (HDIM, 1)
    b2c = b2.astype(jnp.float32).reshape(1, 1)                    # (1, 1)

    x = x_bchw_u8.reshape(B, C, HW)       # uint8, channels-first, HW on lanes

    def kernel(x_ref, w1t_ref, b1_ref, w2_ref, b2_ref, out_ref, acc_ref):
        k = pl.program_id(1)

        @pl.when(k == 0)
        def _init():
            acc_ref[...] = jnp.zeros_like(acc_ref)

        w1t_v = w1t_ref[...]               # (HDIM, C)  folded conv weight
        b1_v = b1_ref[...]                 # (HDIM, 1)  folded bias

        for b in range(bt):                # static unroll over the batch tile
            # uint8 pixels -> f32 after the DMA; normalization folded in w1/b1.
            xt = x_ref[b].astype(jnp.float32)                 # (C, hw_tile)
            # K=C channel contraction on the otherwise-idle MXU.
            h = jnp.dot(w1t_v, xt, preferred_element_type=jnp.float32)
            h = jnp.maximum(h + b1_v, 0.0)                    # bias + ReLU (VPU)
            # Lane-partial spatial sum -> (HDIM, 128): tree of lane-aligned
            # vreg adds; the single cross-lane XLU reduce waits for finalize.
            if n128 > 1:
                chunks = [h[:, i * 128:(i + 1) * 128] for i in range(n128)]
                while len(chunks) > 1:
                    nxt = [chunks[j] + chunks[j + 1]
                           for j in range(0, len(chunks) - 1, 2)]
                    if len(chunks) % 2:
                        nxt.append(chunks[-1])
                    chunks = nxt
                part = chunks[0]
            else:
                part = h
            acc_ref[b] = acc_ref[b] + part

        @pl.when(k == pl.num_programs(1) - 1)
        def _finalize():
            w2_v = w2_ref[...]             # (HDIM, 1), already includes 1/HW
            b2_v = b2_ref[...]             # (1, 1)
            for b in range(bt):
                pooled = jnp.sum(acc_ref[b], axis=1, keepdims=True)      # (HDIM, 1)
                logit = jnp.sum(pooled * w2_v, axis=0, keepdims=True) + b2_v
                # predicted_class = (sigmoid(logit) > 0.5)  <=>  logit > 0
                cls = (logit > 0.0).astype(jnp.float32)                  # (1, 1)
                out_ref[b] = jnp.broadcast_to(cls, (1, 128))

    out = pl.pallas_call(
        kernel,
        out_shape=jax.ShapeDtypeStruct((B, 1, 128), jnp.float32),
        grid_spec=pltpu.PrefetchScalarGridSpec(
            num_scalar_prefetch=0,
            grid=(B // bt, k_steps),
            in_specs=[
                pl.BlockSpec((bt, C, hw_tile), lambda g, k: (g, 0, k)),  # image tile
                pl.BlockSpec((HDIM, C), lambda g, k: (0, 0)),            # folded w1^T
                pl.BlockSpec((HDIM, 1), lambda g, k: (0, 0)),            # folded b1
                pl.BlockSpec((HDIM, 1), lambda g, k: (0, 0)),            # head w2 / HW
                pl.BlockSpec((1, 1), lambda g, k: (0, 0)),               # head b2
            ],
            out_specs=pl.BlockSpec((bt, 1, 128), lambda g, k: (g, 0, 0)),
            scratch_shapes=[pltpu.VMEM((bt, HDIM, acc_lanes), jnp.float32)],
        ),
        compiler_params=pltpu.CompilerParams(
            dimension_semantics=("parallel", "arbitrary"),
            vmem_limit_bytes=vmem_limit),
    )(x, w1t, b1c, w2c, b2c)

    return out[:, 0, 0]


def reference(x_bchw_u8, mean, std, w1, b1, w2, b2):
    """Pure-JAX reference matching the original PyTorch math."""
    B, C, H, W = x_bchw_u8.shape
    x = x_bchw_u8.astype(jnp.float32) / 255.0
    xn = (x - mean.reshape(1, C, 1, 1)) / std.reshape(1, C, 1, 1)
    xn = xn.reshape(B, C, H * W)
    h = jnp.maximum(jnp.einsum('bcp,ch->bph', xn, w1) + b1.reshape(1, 1, -1), 0.0)
    pooled = jnp.mean(h, axis=1)                         # (B, HDIM)
    logit = pooled @ w2 + b2.reshape(1, 1)               # (B, 1)
    return (jax.nn.sigmoid(logit) > 0.5).astype(jnp.float32)[:, 0]


if __name__ == "__main__":
    # Small shapes consistent with the forward (real path uses 3x224x224 crops).
    B, C, H, W = 2, 3, 32, 32
    HDIM = 32

    key = jax.random.PRNGKey(0)
    k_img, k_w1, k_b1, k_w2, k_b2 = jax.random.split(key, 5)

    # Synthetic "cropped image" batch: integer pixel values in [0, 255], NCHW uint8.
    x = jax.random.randint(k_img, (B, C, H, W), 0, 256, dtype=jnp.int32).astype(jnp.uint8)

    # ImageNet normalization constants from preprocess_image.
    mean = jnp.array([0.485, 0.456, 0.406], jnp.float32)
    std = jnp.array([0.229, 0.224, 0.225], jnp.float32)

    # Deterministic stand-in classifier parameters.
    w1 = jax.random.normal(k_w1, (C, HDIM), jnp.float32) * 0.2
    b1 = jax.random.normal(k_b1, (HDIM,), jnp.float32) * 0.1
    w2 = jax.random.normal(k_w2, (HDIM, 1), jnp.float32) * 0.2
    b2 = jax.random.normal(k_b2, (1,), jnp.float32) * 0.1

    ref = reference(x, mean, std, w1, b1, w2, b2)

    # Default path: one big spatial tile per image, batch-tiled (bt = B here).
    pred = quality_classifier(x, mean, std, w1, b1, w2, b2)
    jax.block_until_ready(pred)
    assert pred.shape == (B,)
    assert jnp.allclose(pred, ref), (pred, ref)

    # Multi-step path: forces k_steps > 1 to exercise the (HDIM, 128)
    # accumulator init/accumulate/finalize logic (same structure as the real
    # 224x224 path, which runs 4 steps of hw_tile=12544).
    pred2 = quality_classifier(x, mean, std, w1, b1, w2, b2,
                               max_hw_tile=256, max_batch_tile=1)
    jax.block_until_ready(pred2)
    assert jnp.allclose(pred2, ref), (pred2, ref)

    print("KERNEL_OK")
</pallas_src>

<mosaic_0001>
module attributes {stable_mosaic.version = 11 : i64} {
  func.func @kernel(%arg0: i32, %arg1: i32, %arg2: memref<2x3x1024xi8, #tpu.memory_space<vmem>>, %arg3: memref<32x3xf32, #tpu.memory_space<vmem>>, %arg4: memref<32x1xf32, #tpu.memory_space<vmem>>, %arg5: memref<32x1xf32, #tpu.memory_space<vmem>>, %arg6: memref<1x1xf32, #tpu.memory_space<vmem>>, %arg7: memref<2x1x128xf32, #tpu.memory_space<vmem>>, %arg8: memref<2x32x128xf32, #tpu.memory_space<vmem>>) attributes {dimension_semantics = [#tpu.dimension_semantics<parallel>, #tpu.dimension_semantics<arbitrary>], iteration_bounds = array<i64: 1, 1>, scalar_prefetch = 0 : i64, scratch_operands = 1 : i64, tpu.core_type = #tpu.core_type<tc>, window_params = [{transform_indices = @transform_0, window_bounds = array<i64: 2, 3, 1024>}, {pipeline_mode = #tpu.pipeline_mode<synchronous>, transform_indices = @transform_1, window_bounds = array<i64: 32, 3>}, {pipeline_mode = #tpu.pipeline_mode<synchronous>, transform_indices = @transform_2, window_bounds = array<i64: 32, 1>}, {pipeline_mode = #tpu.pipeline_mode<synchronous>, transform_indices = @transform_3, window_bounds = array<i64: 32, 1>}, {pipeline_mode = #tpu.pipeline_mode<synchronous>, transform_indices = @transform_4, window_bounds = array<i64: 1, 1>}, {transform_indices = @transform_5, window_bounds = array<i64: 2, 1, 128>}]} {
    %c0_i32 = arith.constant 0 : i32
    %0 = arith.cmpi eq, %arg1, %c0_i32 : i32
    %1 = arith.extui %0 : i1 to i32
    %c0_i32_0 = arith.constant 0 : i32
    %2 = arith.cmpi ne, %1, %c0_i32_0 : i32
    scf.if %2 {
      %cst_26 = arith.constant 0.000000e+00 : f32
      %66 = vector.broadcast %cst_26 : f32 to vector<2x32x128xf32>
      %c0_27 = arith.constant 0 : index
      %c0_28 = arith.constant 0 : index
      %c0_29 = arith.constant 0 : index
      %67 = vector.load %arg8[%c0_27, %c0_28, %c0_29] : memref<2x32x128xf32, #tpu.memory_space<vmem>>, vector<2x32x128xf32>
      tpu.vector_store %arg8[%c0_27, %c0_28, %c0_29], %66 {strides = array<i32>} : memref<2x32x128xf32, #tpu.memory_space<vmem>>, vector<2x32x128xf32>,
    } else {
    }
    %c0 = arith.constant 0 : index
    %c0_1 = arith.constant 0 : index
    %3 = vector.load %arg3[%c0, %c0_1] : memref<32x3xf32, #tpu.memory_space<vmem>>, vector<32x3xf32>
    %c0_2 = arith.constant 0 : index
    %c0_3 = arith.constant 0 : index
    %4 = vector.load %arg4[%c0_2, %c0_3] : memref<32x1xf32, #tpu.memory_space<vmem>>, vector<32x1xf32>
    %c0_4 = arith.constant 0 : index
    %c0_5 = arith.constant 0 : index
    %c0_6 = arith.constant 0 : index
    %5 = vector.load %arg2[%c0_4, %c0_5, %c0_6] : memref<2x3x1024xi8, #tpu.memory_space<vmem>>, vector<1x3x1024xi8>
    %6 = vector.shape_cast %5 : vector<1x3x1024xi8> to vector<3x1024xi8>
    %7 = arith.uitofp %6 : vector<3x1024xi8> to vector<3x1024xf32>
    %cst = arith.constant dense<0.000000e+00> : vector<32x1024xf32>
    %8 = tpu.matmul %3, %7, %cst {dimension_numbers = #tpu.dot_dimension_numbers<[1], [0], [0], [1], [0, 0, 1, 1], [], []>} : vector<32x3xf32>, vector<3x1024xf32>, vector<32x1024xf32> -> vector<32x1024xf32>
    %9 = vector.broadcast %4 : vector<32x1xf32> to vector<32x1024xf32>
    %10 = arith.addf %8, %9 : vector<32x1024xf32>
    %cst_7 = arith.constant 0.000000e+00 : f32
    %11 = vector.broadcast %cst_7 : f32 to vector<32x1024xf32>
    %12 = arith.maximumf %10, %11 : vector<32x1024xf32>
    %13 = vector.extract_strided_slice %12 {offsets = [0, 0], sizes = [32, 128], strides = [1, 1]} : vector<32x1024xf32> to vector<32x128xf32>
    %14 = vector.extract_strided_slice %12 {offsets = [0, 128], sizes = [32, 128], strides = [1, 1]} : vector<32x1024xf32> to vector<32x128xf32>
    %15 = vector.extract_strided_slice %12 {offsets = [0, 256], sizes = [32, 128], strides = [1, 1]} : vector<32x1024xf32> to vector<32x128xf32>
    %16 = vector.extract_strided_slice %12 {offsets = [0, 384], sizes = [32, 128], strides = [1, 1]} : vector<32x1024xf32> to vector<32x128xf32>
    %17 = vector.extract_strided_slice %12 {offsets = [0, 512], sizes = [32, 128], strides = [1, 1]} : vector<32x1024xf32> to vector<32x128xf32>
    %18 = vector.extract_strided_slice %12 {offsets = [0, 640], sizes = [32, 128], strides = [1, 1]} : vector<32x1024xf32> to vector<32x128xf32>
    %19 = vector.extract_strided_slice %12 {offsets = [0, 768], sizes = [32, 128], strides = [1, 1]} : vector<32x1024xf32> to vector<32x128xf32>
    %20 = vector.extract_strided_slice %12 {offsets = [0, 896], sizes = [32, 128], strides = [1, 1]} : vector<32x1024xf32> to vector<32x128xf32>
    %21 = arith.addf %13, %14 : vector<32x128xf32>
    %22 = arith.addf %15, %16 : vector<32x128xf32>
    %23 = arith.addf %17, %18 : vector<32x128xf32>
    %24 = arith.addf %19, %20 : vector<32x128xf32>
    %25 = arith.addf %21, %22 : vector<32x128xf32>
    %26 = arith.addf %23, %24 : vector<32x128xf32>
    %27 = arith.addf %25, %26 : vector<32x128xf32>
    %c0_8 = arith.constant 0 : index
    %c0_9 = arith.constant 0 : index
    %c0_10 = arith.constant 0 : index
    %28 = vector.load %arg8[%c0_8, %c0_9, %c0_10] : memref<2x32x128xf32, #tpu.memory_space<vmem>>, vector<1x32x128xf32>
    %29 = vector.shape_cast %28 : vector<1x32x128xf32> to vector<32x128xf32>
    %30 = arith.addf %29, %27 : vector<32x128xf32>
    %c0_11 = arith.constant 0 : index
    %c0_12 = arith.constant 0 : index
    %c0_13 = arith.constant 0 : index
    %31 = vector.load %arg8[%c0_11, %c0_12, %c0_13] : memref<2x32x128xf32, #tpu.memory_space<vmem>>, vector<1x32x128xf32>
    %32 = vector.shape_cast %31 : vector<1x32x128xf32> to vector<32x128xf32>
    %33 = vector.shape_cast %30 : vector<32x128xf32> to vector<1x32x128xf32>
    tpu.vector_store %arg8[%c0_11, %c0_12, %c0_13], %33 {strides = array<i32>} : memref<2x32x128xf32, #tpu.memory_space<vmem>>, vector<1x32x128xf32>,
    %c1 = arith.constant 1 : index
    %c0_14 = arith.constant 0 : index
    %c0_15 = arith.constant 0 : index
    %34 = vector.load %arg2[%c1, %c0_14, %c0_15] : memref<2x3x1024xi8, #tpu.memory_space<vmem>>, vector<1x3x1024xi8>
    %35 = vector.shape_cast %34 : vector<1x3x1024xi8> to vector<3x1024xi8>
    %36 = arith.uitofp %35 : vector<3x1024xi8> to vector<3x1024xf32>
    %cst_16 = arith.constant dense<0.000000e+00> : vector<32x1024xf32>
    %37 = tpu.matmul %3, %36, %cst_16 {dimension_numbers = #tpu.dot_dimension_numbers<[1], [0], [0], [1], [0, 0, 1, 1], [], []>} : vector<32x3xf32>, vector<3x1024xf32>, vector<32x1024xf32> -> vector<32x1024xf32>
    %38 = vector.broadcast %4 : vector<32x1xf32> to vector<32x1024xf32>
    %39 = arith.addf %37, %38 : vector<32x1024xf32>
    %cst_17 = arith.constant 0.000000e+00 : f32
    %40 = vector.broadcast %cst_17 : f32 to vector<32x1024xf32>
    %41 = arith.maximumf %39, %40 : vector<32x1024xf32>
    %42 = vector.extract_strided_slice %41 {offsets = [0, 0], sizes = [32, 128], strides = [1, 1]} : vector<32x1024xf32> to vector<32x128xf32>
    %43 = vector.extract_strided_slice %41 {offsets = [0, 128], sizes = [32, 128], strides = [1, 1]} : vector<32x1024xf32> to vector<32x128xf32>
    %44 = vector.extract_strided_slice %41 {offsets = [0, 256], sizes = [32, 128], strides = [1, 1]} : vector<32x1024xf32> to vector<32x128xf32>
    %45 = vector.extract_strided_slice %41 {offsets = [0, 384], sizes = [32, 128], strides = [1, 1]} : vector<32x1024xf32> to vector<32x128xf32>
    %46 = vector.extract_strided_slice %41 {offsets = [0, 512], sizes = [32, 128], strides = [1, 1]} : vector<32x1024xf32> to vector<32x128xf32>
    %47 = vector.extract_strided_slice %41 {offsets = [0, 640], sizes = [32, 128], strides = [1, 1]} : vector<32x1024xf32> to vector<32x128xf32>
    %48 = vector.extract_strided_slice %41 {offsets = [0, 768], sizes = [32, 128], strides = [1, 1]} : vector<32x1024xf32> to vector<32x128xf32>
    %49 = vector.extract_strided_slice %41 {offsets = [0, 896], sizes = [32, 128], strides = [1, 1]} : vector<32x1024xf32> to vector<32x128xf32>
    %50 = arith.addf %42, %43 : vector<32x128xf32>
    %51 = arith.addf %44, %45 : vector<32x128xf32>
    %52 = arith.addf %46, %47 : vector<32x128xf32>
    %53 = arith.addf %48, %49 : vector<32x128xf32>
    %54 = arith.addf %50, %51 : vector<32x128xf32>
    %55 = arith.addf %52, %53 : vector<32x128xf32>
    %56 = arith.addf %54, %55 : vector<32x128xf32>
    %c1_18 = arith.constant 1 : index
    %c0_19 = arith.constant 0 : index
    %c0_20 = arith.constant 0 : index
    %57 = vector.load %arg8[%c1_18, %c0_19, %c0_20] : memref<2x32x128xf32, #tpu.memory_space<vmem>>, vector<1x32x128xf32>
    %58 = vector.shape_cast %57 : vector<1x32x128xf32> to vector<32x128xf32>
    %59 = arith.addf %58, %56 : vector<32x128xf32>
    %c1_21 = arith.constant 1 : index
    %c0_22 = arith.constant 0 : index
    %c0_23 = arith.constant 0 : index
    %60 = vector.load %arg8[%c1_21, %c0_22, %c0_23] : memref<2x32x128xf32, #tpu.memory_space<vmem>>, vector<1x32x128xf32>
    %61 = vector.shape_cast %60 : vector<1x32x128xf32> to vector<32x128xf32>
    %62 = vector.shape_cast %59 : vector<32x128xf32> to vector<1x32x128xf32>
    tpu.vector_store %arg8[%c1_21, %c0_22, %c0_23], %62 {strides = array<i32>} : memref<2x32x128xf32, #tpu.memory_space<vmem>>, vector<1x32x128xf32>,
    %c0_i32_24 = arith.constant 0 : i32
    %63 = arith.cmpi eq, %arg1, %c0_i32_24 : i32
    %64 = arith.extui %63 : i1 to i32
    %c0_i32_25 = arith.constant 0 : i32
    %65 = arith.cmpi ne, %64, %c0_i32_25 : i32
    scf.if %65 {
      %c0_26 = arith.constant 0 : index
      %c0_27 = arith.constant 0 : index
      %66 = vector.load %arg5[%c0_26, %c0_27] : memref<32x1xf32, #tpu.memory_space<vmem>>, vector<32x1xf32>
      %c0_28 = arith.constant 0 : index
      %c0_29 = arith.constant 0 : index
      %67 = vector.load %arg6[%c0_28, %c0_29] : memref<1x1xf32, #tpu.memory_space<vmem>>, vector<1x1xf32>
      %c0_30 = arith.constant 0 : index
      %c0_31 = arith.constant 0 : index
      %c0_32 = arith.constant 0 : index
      %68 = vector.load %arg8[%c0_30, %c0_31, %c0_32] : memref<2x32x128xf32, #tpu.memory_space<vmem>>, vector<1x32x128xf32>
      %69 = vector.shape_cast %68 : vector<1x32x128xf32> to vector<32x128xf32>
      %cst_33 = arith.constant dense<0.000000e+00> : vector<32xf32>
      %70 = vector.multi_reduction <add>, %69, %cst_33 [1] : vector<32x128xf32> to vector<32xf32>
      %71 = vector.shape_cast %70 : vector<32xf32> to vector<32x1xf32>
      %72 = arith.mulf %71, %66 : vector<32x1xf32>
      %cst_34 = arith.constant dense<0.000000e+00> : vector<1xf32>
      %73 = vector.multi_reduction <add>, %72, %cst_34 [0] : vector<32x1xf32> to vector<1xf32>
      %74 = vector.shape_cast %73 : vector<1xf32> to vector<1x1xf32>
      %75 = arith.addf %74, %67 : vector<1x1xf32>
      %cst_35 = arith.constant 0.000000e+00 : f32
      %76 = vector.broadcast %cst_35 : f32 to vector<1x1xf32>
      %77 = arith.cmpf ogt, %75, %76 : vector<1x1xf32>
      %78 = arith.extui %77 : vector<1x1xi1> to vector<1x1xi32>
      %79 = arith.sitofp %78 : vector<1x1xi32> to vector<1x1xf32>
      %80 = vector.shape_cast %79 : vector<1x1xf32> to vector<1x1xf32>
      %81 = vector.broadcast %80 : vector<1x1xf32> to vector<1x128xf32>
      %c0_36 = arith.constant 0 : index
      %c0_37 = arith.constant 0 : index
      %c0_38 = arith.constant 0 : index
      %82 = vector.load %arg7[%c0_36, %c0_37, %c0_38] : memref<2x1x128xf32, #tpu.memory_space<vmem>>, vector<1x1x128xf32>
      %83 = vector.shape_cast %82 : vector<1x1x128xf32> to vector<1x128xf32>
      %84 = vector.shape_cast %81 : vector<1x128xf32> to vector<1x1x128xf32>
      tpu.vector_store %arg7[%c0_36, %c0_37, %c0_38], %84 {strides = array<i32>} : memref<2x1x128xf32, #tpu.memory_space<vmem>>, vector<1x1x128xf32>,
      %c1_39 = arith.constant 1 : index
      %c0_40 = arith.constant 0 : index
      %c0_41 = arith.constant 0 : index
      %85 = vector.load %arg8[%c1_39, %c0_40, %c0_41] : memref<2x32x128xf32, #tpu.memory_space<vmem>>, vector<1x32x128xf32>
      %86 = vector.shape_cast %85 : vector<1x32x128xf32> to vector<32x128xf32>
      %cst_42 = arith.constant dense<0.000000e+00> : vector<32xf32>
      %87 = vector.multi_reduction <add>, %86, %cst_42 [1] : vector<32x128xf32> to vector<32xf32>
      %88 = vector.shape_cast %87 : vector<32xf32> to vector<32x1xf32>
      %89 = arith.mulf %88, %66 : vector<32x1xf32>
      %cst_43 = arith.constant dense<0.000000e+00> : vector<1xf32>
      %90 = vector.multi_reduction <add>, %89, %cst_43 [0] : vector<32x1xf32> to vector<1xf32>
      %91 = vector.shape_cast %90 : vector<1xf32> to vector<1x1xf32>
      %92 = arith.addf %91, %67 : vector<1x1xf32>
      %cst_44 = arith.constant 0.000000e+00 : f32
      %93 = vector.broadcast %cst_44 : f32 to vector<1x1xf32>
      %94 = arith.cmpf ogt, %92, %93 : vector<1x1xf32>
      %95 = arith.extui %94 : vector<1x1xi1> to vector<1x1xi32>
      %96 = arith.sitofp %95 : vector<1x1xi32> to vector<1x1xf32>
      %97 = vector.shape_cast %96 : vector<1x1xf32> to vector<1x1xf32>
      %98 = vector.broadcast %97 : vector<1x1xf32> to vector<1x128xf32>
      %c1_45 = arith.constant 1 : index
      %c0_46 = arith.constant 0 : index
      %c0_47 = arith.constant 0 : index
      %99 = vector.load %arg7[%c1_45, %c0_46, %c0_47] : memref<2x1x128xf32, #tpu.memory_space<vmem>>, vector<1x1x128xf32>
      %100 = vector.shape_cast %99 : vector<1x1x128xf32> to vector<1x128xf32>
      %101 = vector.shape_cast %98 : vector<1x128xf32> to vector<1x1x128xf32>
      tpu.vector_store %arg7[%c1_45, %c0_46, %c0_47], %101 {strides = array<i32>} : memref<2x1x128xf32, #tpu.memory_space<vmem>>, vector<1x1x128xf32>,
    } else {
    }
    return
  }
  func.func @transform_0(%arg0: i32, %arg1: i32) -> (i32, i32, i32) {
    %c0_i32 = arith.constant 0 : i32
    %c0_i32_0 = arith.constant 0 : i32
    return %arg0, %c0_i32, %arg1 : i32, i32, i32
  }
  func.func @transform_1(%arg0: i32, %arg1: i32) -> (i32, i32) {
    %c0_i32 = arith.constant 0 : i32
    %c0_i32_0 = arith.constant 0 : i32
    %c0_i32_1 = arith.constant 0 : i32
    return %c0_i32, %c0_i32_0 : i32, i32
  }
  func.func @transform_2(%arg0: i32, %arg1: i32) -> (i32, i32) {
    %c0_i32 = arith.constant 0 : i32
    %c0_i32_0 = arith.constant 0 : i32
    %c0_i32_1 = arith.constant 0 : i32
    return %c0_i32, %c0_i32_0 : i32, i32
  }
  func.func @transform_3(%arg0: i32, %arg1: i32) -> (i32, i32) {
    %c0_i32 = arith.constant 0 : i32
    %c0_i32_0 = arith.constant 0 : i32
    %c0_i32_1 = arith.constant 0 : i32
    return %c0_i32, %c0_i32_0 : i32, i32
  }
  func.func @transform_4(%arg0: i32, %arg1: i32) -> (i32, i32) {
    %c0_i32 = arith.constant 0 : i32
    %c0_i32_0 = arith.constant 0 : i32
    %c0_i32_1 = arith.constant 0 : i32
    return %c0_i32, %c0_i32_0 : i32, i32
  }
  func.func @transform_5(%arg0: i32, %arg1: i32) -> (i32, i32, i32) {
    %c0_i32 = arith.constant 0 : i32
    %c0_i32_0 = arith.constant 0 : i32
    %c0_i32_1 = arith.constant 0 : i32
    return %arg0, %c0_i32, %c0_i32_0 : i32, i32, i32
  }
}

</mosaic_0001>

<llo_original>
// kernel: tpu_custom_call.1
$region0: #{tpu_custom_call.1}
  #allocation0 [shape = 'u32[]', space=smem, size = 0x4, offset = 0x4, fixed_abs, tag = 'smem constant byte address 0x4 - core index']
  #allocation1 [shape = 'u32[144,128]{1,0:T(1,128)}', space=vmem, size = 0x12000, scoped, tag = 'internal scratch']
  #allocation2 [shape = 'f32[2,32,128]{2,1,0:T(8,128)}', space=vmem, size = 0x8000, scoped, tag = 'scratch operand']
  #allocation3 [shape = 'f32[1,1]{1,0:T(1,128)S(1)}', space=vmem, size = 0x200, scoped, tag = 'scoped memory for tpu_custom_call.1']
  %s0 = inlined_call_operand.vmem [shape: u8[2,3,1024], index: 0, kind: input, shape index: {}]
  %s1 = inlined_call_operand.vmem [shape: f32[32,3], index: 1, kind: input, shape index: {}]
  %s2 = inlined_call_operand.vmem [shape: f32[32,1], index: 2, kind: input, shape index: {}]
  %s3 = inlined_call_operand.vmem [shape: f32[32,1], index: 3, kind: input, shape index: {}]
  %s4 = inlined_call_operand.<no memory space> [shape: f32[1,1], index: 4, kind: input, shape index: {}]
  %s5 = inlined_call_operand.hbm [shape: f32[2,1,128], index: 5, kind: output, shape index: {}]
  %s6 = sld [smem:[#allocation0]]
  $region38: #{tpu_custom_call.1} parent=0
    _
  %s8 = ssub.s32 1, %s6
  %s9 = scalar_select 0, %s8, %s6
  %v10 = vstv %s4
  %11 = vst [vmem:[#allocation3] sm:$0x1] %v10
  $region1: #{tpu_custom_call.1} parent=0
    #allocation4 [shape = 'u8[1024]{0}', space=vmem, size = 0x400, scoped, tag = 'output window, operand 0, single buffered']
    #allocation5 [shape = 's32[1]{0}', space=sflag, size = 0x4, scoped, tag = 'scoped memory for tpu_custom_call.1']
    %12 = vsyncpa [#allocation5], 0
    // Predicated region
    $region2: #{tpu_custom_call.1} parent=1 // pred_check
      _
    $region3: #{tpu_custom_call.1} parent=1 // pred_check_branch
      %14 = sbr.rel (0) target = $region5
    $region4: #{tpu_custom_call.1} parent=1 // pred_region
      _
    $region5: #{tpu_custom_call.1} parent=1 // pred_fallthru
      _
    // Predicated region
    $region6: #{tpu_custom_call.1} parent=1 // pred_check
      _
    $region7: #{tpu_custom_call.1} parent=1 // pred_check_branch
      %16 = sbr.rel (0) target = $region9
    $region8: #{tpu_custom_call.1} parent=1 // pred_region
      _
    $region9: #{tpu_custom_call.1} parent=1 // pred_fallthru
      _
    // Predicated region
    $region10: #{tpu_custom_call.1} parent=1 // pred_check
      _
    $region11: #{tpu_custom_call.1} parent=1 // pred_check_branch
      %18 = sbr.rel (0) target = $region13
    $region12: #{tpu_custom_call.1} parent=1 // pred_region
      _
    $region13: #{tpu_custom_call.1} parent=1 // pred_fallthru
      _
    // Predicated region
    $region14: #{tpu_custom_call.1} parent=1 // pred_check
      _
    $region15: #{tpu_custom_call.1} parent=1 // pred_check_branch
      %20 = sbr.rel (0) target = $region17
    $region16: #{tpu_custom_call.1} parent=1 // pred_region
      _
    $region17: #{tpu_custom_call.1} parent=1 // pred_fallthru
      _
    // Predicated region
    $region18: #{tpu_custom_call.1} parent=1 // pred_check
      _
    $region19: #{tpu_custom_call.1} parent=1 // pred_check_branch
      %22 = sbr.rel (0) target = $region21
    $region20: #{tpu_custom_call.1} parent=1 // pred_region
      _
    $region21: #{tpu_custom_call.1} parent=1 // pred_fallthru
      _
    %p23 = scmp.eq.s32.totalorder 0, 0
    // Predicated region
    $region22: #{tpu_custom_call.1} parent=1 // pred_check
      %p24 = pneg %p23
    $region23: #{tpu_custom_call.1} parent=1 // pred_check_branch
      %26 = sbr.rel (%p24) target = $region25
    $region24: #{tpu_custom_call.1} parent=1 // pred_region
      %27 = vst [vmem:[#allocation2] sm:$0xff] 0.0
      %28 = vst [vmem:[#allocation2 + $0x8] sm:$0xff] 0.0
      %29 = vst [vmem:[#allocation2 + $0x10] sm:$0xff] 0.0
      %30 = vst [vmem:[#allocation2 + $0x18] sm:$0xff] 0.0
      %31 = vst [vmem:[#allocation2 + $0x20] sm:$0xff] 0.0
      %32 = vst [vmem:[#allocation2 + $0x28] sm:$0xff] 0.0
      %33 = vst [vmem:[#allocation2 + $0x30] sm:$0xff] 0.0
      %34 = vst [vmem:[#allocation2 + $0x38] sm:$0xff] 0.0
    $region25: #{tpu_custom_call.1} parent=1 // pred_fallthru
      _
    %v35 = vld [vmem:[%s1] sm:$0xff]
    %v36 = vld [vmem:[%s1 + $0x8] sm:$0xff]
    %v37 = vld [vmem:[%s1 + $0x10] sm:$0xff]
    %v38 = vld [vmem:[%s1 + $0x18] sm:$0xff]
    %v39 = vld [vmem:[%s2] sm:$0xff]
    %v40 = vld [vmem:[%s2 + $0x8] sm:$0xff]
    %v41 = vld [vmem:[%s2 + $0x10] sm:$0xff]
    %v42 = vld [vmem:[%s2 + $0x18] sm:$0xff]
    %v43 = vld [vmem:[%s0] sm:$0xff]
    %v44 = vunpack.c.0.s8 %v43
    %v45 = vunpack.c.1.s8 %v43
    %v46 = vunpack.c.2.s8 %v43
    %v47 = vunpack.c.3.s8 %v43
    %v48 = vand.u32 %v44, 255
    %v49 = vand.u32 %v45, 255
    %v50 = vand.u32 %v46, 255
    %v51 = vand.u32 %v47, 255
    %v52 = vcvt.s32.f32 %v48
    %v53 = vcvt.s32.f32 %v49
    %v54 = vcvt.s32.f32 %v50
    %v55 = vcvt.s32.f32 %v51
    %57 = vset.pattern.permute.xlu0 0
    %58 = vperm.xlu0 %57, %v39
    %v59 = vpop.permute.xlu0 %58
    %62 = vset.pattern.permute.xlu0 0
    %63 = vperm.xlu0 %62, %v40
    %v64 = vpop.permute.xlu0 %63
    %67 = vset.pattern.permute.xlu0 0
    %68 = vperm.xlu0 %67, %v41
    %v69 = vpop.permute.xlu0 %68
    %72 = vset.pattern.permute.xlu0 0
    %73 = vperm.xlu0 %72, %v42
    %v74 = vpop.permute.xlu0 %73
    %v80 = vcombine.high %v52, %v52
    %v81 = vcombine.high %v53, %v53
    %v82 = vcombine.high %v54, %v54
    %v83 = vcombine.high %v55, %v55
    %vm84 = vcmask 23552
    %v86 = vsel %vm84, %v35, 0
    %v89 = vsel %vm84, %v36, 0
    %v92 = vsel %vm84, %v37, 0
    %v95 = vsel %vm84, %v38, 0
    %vm97 = vcmask 1042432
    %v98 = vsel %vm97, %v52, 0
    %v100 = vsel %vm97, %v80, 0
    %v102 = vsel %vm97, %v53, 0
    %v104 = vsel %vm97, %v81, 0
    %v106 = vsel %vm97, %v54, 0
    %v108 = vsel %vm97, %v82, 0
    %v110 = vsel %vm97, %v55, 0
    %v112 = vsel %vm97, %v83, 0
    %114 = vmatprep.subr.mxu0 %v100
    %115 = vmatpush1.msra.mxu0 %v98
    %116 = vmatprep.subr.mxu0 0.0
    %117 = vmatpush1.msra.mxu0 0.0
    %118 = vmatprep.subr.mxu0 0.0
    %119 = vmatpush1.msra.mxu0 0.0
    %120 = vmatprep.subr.mxu0 0.0
    %121 = vmatpush1.msra.mxu0 0.0
    %122 = vmatprep.subr.mxu0 0.0
    %123 = vmatpush1.msra.mxu0 0.0
    %124 = vmatprep.subr.mxu0 0.0
    %125 = vmatpush1.msra.mxu0 0.0
    %126 = vmatprep.subr.mxu0 0.0
    %127 = vmatpush1.msra.mxu0 0.0
    %128 = vmatprep.subr.mxu0 0.0
    %129 = vmatpush1.msra.mxu0 0.0
    %130 = vmatprep.subr.mxu0 0.0
    %131 = vmatpush1.msra.mxu0 0.0
    %132 = vmatprep.subr.mxu0 0.0
    %133 = vmatpush1.msra.mxu0 0.0
    %134 = vmatprep.subr.mxu0 0.0
    %135 = vmatpush1.msra.mxu0 0.0
    %136 = vmatprep.subr.mxu0 0.0
    %137 = vmatpush1.msra.mxu0 0.0
    %138 = vmatprep.subr.mxu0 0.0
    %139 = vmatpush1.msra.mxu0 0.0
    %140 = vmatprep.subr.mxu0 0.0
    %141 = vmatpush1.msra.mxu0 0.0
    %142 = vmatprep.subr.mxu0 0.0
    %143 = vmatpush1.msra.mxu0 0.0
    %144 = vmatprep.subr.mxu0 0.0
    %145 = vmatpush1.msra.mxu0 0.0
    %146 = vmatprep.subr.mxu0 0.0
    %147 = vmatpush1.msra.mxu0 0.0
    %148 = vmatprep.subr.mxu0 0.0
    %149 = vmatpush1.msra.mxu0 0.0
    %150 = vmatprep.subr.mxu0 0.0
    %151 = vmatpush1.msra.mxu0 0.0
    %152 = vmatprep.subr.mxu0 0.0
    %153 = vmatpush1.msra.mxu0 0.0
    %154 = vmatprep.subr.mxu0 0.0
    %155 = vmatpush1.msra.mxu0 0.0
    %156 = vmatprep.subr.mxu0 0.0
    %157 = vmatpush1.msra.mxu0 0.0
    %158 = vmatprep.subr.mxu0 0.0
    %159 = vmatpush1.msra.mxu0 0.0
    %160 = vmatprep.subr.mxu0 0.0
    %161 = vmatpush1.msra.mxu0 0.0
    %162 = vmatprep.subr.mxu0 0.0
    %163 = vmatpush1.msra.mxu0 0.0
    %164 = vmatprep.subr.mxu0 0.0
    %165 = vmatpush1.msra.mxu0 0.0
    %166 = vmatprep.subr.mxu0 0.0
    %167 = vmatpush1.msra.mxu0 0.0
    %168 = vmatprep.subr.mxu0 0.0
    %169 = vmatpush1.msra.mxu0 0.0
    %170 = vmatprep.subr.mxu0 0.0
    %171 = vmatpush1.msra.mxu0 0.0
    %172 = vmatprep.subr.mxu0 0.0
    %173 = vmatpush1.msra.mxu0 0.0
    %174 = vmatprep.subr.mxu0 0.0
    %175 = vmatpush1.msra.mxu0 0.0
    %176 = vmatprep.subr.mxu0 0.0
    %177 = vmatpush1.msra.mxu0 0.0
    %178 = vmatprep.mubr.f32.mxu0 0.0
    %179 = vmatmul.mubr.f32.gmra.mrb[0].mxu0 %v86
    %v180 = vpop.f32.mrb[0].mxu0
    %v181 = vadd.f32 %v59, %v180
    %v182 = vpop.f32.mrb[0].mxu0
    %v183 = vadd.f32 %v59, %v182
    %184 = vmatprep.mubr.f32.mxu0 0.0
    %185 = vmatmul.mubr.f32.gmra.mrb[0].mxu0 %v89
    %v186 = vpop.f32.mrb[0].mxu0
    %v187 = vadd.f32 %v64, %v186
    %v188 = vpop.f32.mrb[0].mxu0
    %v189 = vadd.f32 %v64, %v188
    %190 = vmatprep.mubr.f32.mxu0 0.0
    %191 = vmatmul.mubr.f32.gmra.mrb[0].mxu0 %v92
    %v192 = vpop.f32.mrb[0].mxu0
    %v193 = vadd.f32 %v69, %v192
    %v194 = vpop.f32.mrb[0].mxu0
    %v195 = vadd.f32 %v69, %v194
    %196 = vmatprep.mubr.f32.mxu0 0.0
    %197 = vmatmul.mubr.f32.gmra.mrb[0].mxu0 %v95
    %v198 = vpop.f32.mrb[0].mxu0
    %v199 = vadd.f32 %v74, %v198
    %v200 = vpop.f32.mrb[0].mxu0
    %v201 = vadd.f32 %v74, %v200
    %202 = vdwg.mxu0
    %203 = vmatprep.subr.mxu0 %v104
    %204 = vmatpush1.msra.mxu0 %v102
    %205 = vmatprep.subr.mxu0 0.0
    %206 = vmatpush1.msra.mxu0 0.0
    %207 = vmatprep.subr.mxu0 0.0
    %208 = vmatpush1.msra.mxu0 0.0
    %209 = vmatprep.subr.mxu0 0.0
    %210 = vmatpush1.msra.mxu0 0.0
    %211 = vmatprep.subr.mxu0 0.0
    %212 = vmatpush1.msra.mxu0 0.0
    %213 = vmatprep.subr.mxu0 0.0
    %214 = vmatpush1.msra.mxu0 0.0
    %215 = vmatprep.subr.mxu0 0.0
    %216 = vmatpush1.msra.mxu0 0.0
    %217 = vmatprep.subr.mxu0 0.0
    %218 = vmatpush1.msra.mxu0 0.0
    %219 = vmatprep.subr.mxu0 0.0
    %220 = vmatpush1.msra.mxu0 0.0
    %221 = vmatprep.subr.mxu0 0.0
    %222 = vmatpush1.msra.mxu0 0.0
    %223 = vmatprep.subr.mxu0 0.0
    %224 = vmatpush1.msra.mxu0 0.0
    %225 = vmatprep.subr.mxu0 0.0
    %226 = vmatpush1.msra.mxu0 0.0
    %227 = vmatprep.subr.mxu0 0.0
    %228 = vmatpush1.msra.mxu0 0.0
    %229 = vmatprep.subr.mxu0 0.0
    %230 = vmatpush1.msra.mxu0 0.0
    %231 = vmatprep.subr.mxu0 0.0
    %232 = vmatpush1.msra.mxu0 0.0
    %233 = vmatprep.subr.mxu0 0.0
    %234 = vmatpush1.msra.mxu0 0.0
    %235 = vmatprep.subr.mxu0 0.0
    %236 = vmatpush1.msra.mxu0 0.0
    %237 = vmatprep.subr.mxu0 0.0
    %238 = vmatpush1.msra.mxu0 0.0
    %239 = vmatprep.subr.mxu0 0.0
    %240 = vmatpush1.msra.mxu0 0.0
    %241 = vmatprep.subr.mxu0 0.0
    %242 = vmatpush1.msra.mxu0 0.0
    %243 = vmatprep.subr.mxu0 0.0
    %244 = vmatpush1.msra.mxu0 0.0
    %245 = vmatprep.subr.mxu0 0.0
    %246 = vmatpush1.msra.mxu0 0.0
    %247 = vmatprep.subr.mxu0 0.0
    %248 = vmatpush1.msra.mxu0 0.0
    %249 = vmatprep.subr.mxu0 0.0
    %250 = vmatpush1.msra.mxu0 0.0
    %251 = vmatprep.subr.mxu0 0.0
    %252 = vmatpush1.msra.mxu0 0.0
    %253 = vmatprep.subr.mxu0 0.0
    %254 = vmatpush1.msra.mxu0 0.0
    %255 = vmatprep.subr.mxu0 0.0
    %256 = vmatpush1.msra.mxu0 0.0
    %257 = vmatprep.subr.mxu0 0.0
    %258 = vmatpush1.msra.mxu0 0.0
    %259 = vmatprep.subr.mxu0 0.0
    %260 = vmatpush1.msra.mxu0 0.0
    %261 = vmatprep.subr.mxu0 0.0
    %262 = vmatpush1.msra.mxu0 0.0
    %263 = vmatprep.subr.mxu0 0.0
    %264 = vmatpush1.msra.mxu0 0.0
    %265 = vmatprep.subr.mxu0 0.0
    %266 = vmatpush1.msra.mxu0 0.0
    %267 = vmatprep.mubr.f32.mxu0 0.0
    %268 = vmatmul.mubr.f32.gmra.mrb[0].mxu0 %v86
    %v269 = vpop.f32.mrb[0].mxu0
    %v270 = vadd.f32 %v59, %v269
    %v271 = vpop.f32.mrb[0].mxu0
    %v272 = vadd.f32 %v59, %v271
    %273 = vmatprep.mubr.f32.mxu0 0.0
    %274 = vmatmul.mubr.f32.gmra.mrb[0].mxu0 %v89
    %v275 = vpop.f32.mrb[0].mxu0
    %v276 = vadd.f32 %v64, %v275
    %v277 = vpop.f32.mrb[0].mxu0
    %v278 = vadd.f32 %v64, %v277
    %279 = vmatprep.mubr.f32.mxu0 0.0
    %280 = vmatmul.mubr.f32.gmra.mrb[0].mxu0 %v92
    %v281 = vpop.f32.mrb[0].mxu0
    %v282 = vadd.f32 %v69, %v281
    %v283 = vpop.f32.mrb[0].mxu0
    %v284 = vadd.f32 %v69, %v283
    %285 = vmatprep.mubr.f32.mxu0 0.0
    %286 = vmatmul.mubr.f32.gmra.mrb[0].mxu0 %v95
    %v287 = vpop.f32.mrb[0].mxu0
    %v288 = vadd.f32 %v74, %v287
    %v289 = vpop.f32.mrb[0].mxu0
    %v290 = vadd.f32 %v74, %v289
    %291 = vdwg.mxu0
    %292 = vmatprep.subr.mxu0 %v108
    %293 = vmatpush1.msra.mxu0 %v106
    %294 = vmatprep.subr.mxu0 0.0
    %295 = vmatpush1.msra.mxu0 0.0
    %296 = vmatprep.subr.mxu0 0.0
    %297 = vmatpush1.msra.mxu0 0.0
    %298 = vmatprep.subr.mxu0 0.0
    %299 = vmatpush1.msra.mxu0 0.0
    %300 = vmatprep.subr.mxu0 0.0
    %301 = vmatpush1.msra.mxu0 0.0
    %302 = vmatprep.subr.mxu0 0.0
    %303 = vmatpush1.msra.mxu0 0.0
    %304 = vmatprep.subr.mxu0 0.0
    %305 = vmatpush1.msra.mxu0 0.0
    %306 = vmatprep.subr.mxu0 0.0
    %307 = vmatpush1.msra.mxu0 0.0
    %308 = vmatprep.subr.mxu0 0.0
    %309 = vmatpush1.msra.mxu0 0.0
    %310 = vmatprep.subr.mxu0 0.0
    %311 = vmatpush1.msra.mxu0 0.0
    %312 = vmatprep.subr.mxu0 0.0
    %313 = vmatpush1.msra.mxu0 0.0
    %314 = vmatprep.subr.mxu0 0.0
    %315 = vmatpush1.msra.mxu0 0.0
    %316 = vmatprep.subr.mxu0 0.0
    %317 = vmatpush1.msra.mxu0 0.0
    %318 = vmatprep.subr.mxu0 0.0
    %319 = vmatpush1.msra.mxu0 0.0
    %320 = vmatprep.subr.mxu0 0.0
    %321 = vmatpush1.msra.mxu0 0.0
    %322 = vmatprep.subr.mxu0 0.0
    %323 = vmatpush1.msra.mxu0 0.0
    %324 = vmatprep.subr.mxu0 0.0
    %325 = vmatpush1.msra.mxu0 0.0
    %326 = vmatprep.subr.mxu0 0.0
    %327 = vmatpush1.msra.mxu0 0.0
    %328 = vmatprep.subr.mxu0 0.0
    %329 = vmatpush1.msra.mxu0 0.0
    %330 = vmatprep.subr.mxu0 0.0
    %331 = vmatpush1.msra.mxu0 0.0
    %332 = vmatprep.subr.mxu0 0.0
    %333 = vmatpush1.msra.mxu0 0.0
    %334 = vmatprep.subr.mxu0 0.0
    %335 = vmatpush1.msra.mxu0 0.0
    %336 = vmatprep.subr.mxu0 0.0
    %337 = vmatpush1.msra.mxu0 0.0
    %338 = vmatprep.subr.mxu0 0.0
    %339 = vmatpush1.msra.mxu0 0.0
    %340 = vmatprep.subr.mxu0 0.0
    %341 = vmatpush1.msra.mxu0 0.0
    %342 = vmatprep.subr.mxu0 0.0
    %343 = vmatpush1.msra.mxu0 0.0
    %344 = vmatprep.subr.mxu0 0.0
    %345 = vmatpush1.msra.mxu0 0.0
    %346 = vmatprep.subr.mxu0 0.0
    %347 = vmatpush1.msra.mxu0 0.0
    %348 = vmatprep.subr.mxu0 0.0
    %349 = vmatpush1.msra.mxu0 0.0
    %350 = vmatprep.subr.mxu0 0.0
    %351 = vmatpush1.msra.mxu0 0.0
    %352 = vmatprep.subr.mxu0 0.0
    %353 = vmatpush1.msra.mxu0 0.0
    %354 = vmatprep.subr.mxu0 0.0
    %355 = vmatpush1.msra.mxu0 0.0
    %356 = vmatprep.mubr.f32.mxu0 0.0
    %357 = vmatmul.mubr.f32.gmra.mrb[0].mxu0 %v86
    %v358 = vpop.f32.mrb[0].mxu0
    %v359 = vadd.f32 %v59, %v358
    %v360 = vpop.f32.mrb[0].mxu0
    %v361 = vadd.f32 %v59, %v360
    %362 = vmatprep.mubr.f32.mxu0 0.0
    %363 = vmatmul.mubr.f32.gmra.mrb[0].mxu0 %v89
    %v364 = vpop.f32.mrb[0].mxu0
    %v365 = vadd.f32 %v64, %v364
    %v366 = vpop.f32.mrb[0].mxu0
    %v367 = vadd.f32 %v64, %v366
    %368 = vmatprep.mubr.f32.mxu0 0.0
    %369 = vmatmul.mubr.f32.gmra.mrb[0].mxu0 %v92
    %v370 = vpop.f32.mrb[0].mxu0
    %v371 = vadd.f32 %v69, %v370
    %v372 = vpop.f32.mrb[0].mxu0
    %v373 = vadd.f32 %v69, %v372
    %374 = vmatprep.mubr.f32.mxu0 0.0
    %375 = vmatmul.mubr.f32.gmra.mrb[0].mxu0 %v95
    %v376 = vpop.f32.mrb[0].mxu0
    %v377 = vadd.f32 %v74, %v376
    %v378 = vpop.f32.mrb[0].mxu0
    %v379 = vadd.f32 %v74, %v378
    %380 = vdwg.mxu0
    %381 = vmatprep.subr.mxu0 %v112
    %382 = vmatpush1.msra.mxu0 %v110
    %383 = vmatprep.subr.mxu0 0.0
    %384 = vmatpush1.msra.mxu0 0.0
    %385 = vmatprep.subr.mxu0 0.0
    %386 = vmatpush1.msra.mxu0 0.0
    %387 = vmatprep.subr.mxu0 0.0
    %388 = vmatpush1.msra.mxu0 0.0
    %389 = vmatprep.subr.mxu0 0.0
    %390 = vmatpush1.msra.mxu0 0.0
    %391 = vmatprep.subr.mxu0 0.0
    %392 = vmatpush1.msra.mxu0 0.0
    %393 = vmatprep.subr.mxu0 0.0
    %394 = vmatpush1.msra.mxu0 0.0
    %395 = vmatprep.subr.mxu0 0.0
    %396 = vmatpush1.msra.mxu0 0.0
    %397 = vmatprep.subr.mxu0 0.0
    %398 = vmatpush1.msra.mxu0 0.0
    %399 = vmatprep.subr.mxu0 0.0
    %400 = vmatpush1.msra.mxu0 0.0
    %401 = vmatprep.subr.mxu0 0.0
    %402 = vmatpush1.msra.mxu0 0.0
    %403 = vmatprep.subr.mxu0 0.0
    %404 = vmatpush1.msra.mxu0 0.0
    %405 = vmatprep.subr.mxu0 0.0
    %406 = vmatpush1.msra.mxu0 0.0
    %407 = vmatprep.subr.mxu0 0.0
    %408 = vmatpush1.msra.mxu0 0.0
    %409 = vmatprep.subr.mxu0 0.0
    %410 = vmatpush1.msra.mxu0 0.0
    %411 = vmatprep.subr.mxu0 0.0
    %412 = vmatpush1.msra.mxu0 0.0
    %413 = vmatprep.subr.mxu0 0.0
    %414 = vmatpush1.msra.mxu0 0.0
    %415 = vmatprep.subr.mxu0 0.0
    %416 = vmatpush1.msra.mxu0 0.0
    %417 = vmatprep.subr.mxu0 0.0
    %418 = vmatpush1.msra.mxu0 0.0
    %419 = vmatprep.subr.mxu0 0.0
    %420 = vmatpush1.msra.mxu0 0.0
    %421 = vmatprep.subr.mxu0 0.0
    %422 = vmatpush1.msra.mxu0 0.0
    %423 = vmatprep.subr.mxu0 0.0
    %424 = vmatpush1.msra.mxu0 0.0
    %425 = vmatprep.subr.mxu0 0.0
    %426 = vmatpush1.msra.mxu0 0.0
    %427 = vmatprep.subr.mxu0 0.0
    %428 = vmatpush1.msra.mxu0 0.0
    %429 = vmatprep.subr.mxu0 0.0
    %430 = vmatpush1.msra.mxu0 0.0
    %431 = vmatprep.subr.mxu0 0.0
    %432 = vmatpush1.msra.mxu0 0.0
    %433 = vmatprep.subr.mxu0 0.0
    %434 = vmatpush1.msra.mxu0 0.0
    %435 = vmatprep.subr.mxu0 0.0
    %436 = vmatpush1.msra.mxu0 0.0
    %437 = vmatprep.subr.mxu0 0.0
    %438 = vmatpush1.msra.mxu0 0.0
    %439 = vmatprep.subr.mxu0 0.0
    %440 = vmatpush1.msra.mxu0 0.0
    %441 = vmatprep.subr.mxu0 0.0
    %442 = vmatpush1.msra.mxu0 0.0
    %443 = vmatprep.subr.mxu0 0.0
    %444 = vmatpush1.msra.mxu0 0.0
    %445 = vmatprep.mubr.f32.mxu0 0.0
    %446 = vmatmul.mubr.f32.gmra.mrb[0].mxu0 %v86
    %v447 = vpop.f32.mrb[0].mxu0
    %v448 = vadd.f32 %v59, %v447
    %v449 = vpop.f32.mrb[0].mxu0
    %v450 = vadd.f32 %v59, %v449
    %451 = vmatprep.mubr.f32.mxu0 0.0
    %452 = vmatmul.mubr.f32.gmra.mrb[0].mxu0 %v89
    %v453 = vpop.f32.mrb[0].mxu0
    %v454 = vadd.f32 %v64, %v453
    %v455 = vpop.f32.mrb[0].mxu0
    %v456 = vadd.f32 %v64, %v455
    %457 = vmatprep.mubr.f32.mxu0 0.0
    %458 = vmatmul.mubr.f32.gmra.mrb[0].mxu0 %v92
    %v459 = vpop.f32.mrb[0].mxu0
    %v460 = vadd.f32 %v69, %v459
    %v461 = vpop.f32.mrb[0].mxu0
    %v462 = vadd.f32 %v69, %v461
    %463 = vmatprep.mubr.f32.mxu0 0.0
    %464 = vmatmul.mubr.f32.gmra.mrb[0].mxu0 %v95
    %v465 = vpop.f32.mrb[0].mxu0
    %v466 = vadd.f32 %v74, %v465
    %v467 = vpop.f32.mrb[0].mxu0
    %v468 = vadd.f32 %v74, %v467
    %469 = vdwg.mxu0
    %v470 = vmax.f32 %v181, 0.0
    %v471 = vmax.f32 %v183, 0.0
    %v472 = vmax.f32 %v270, 0.0
    %v473 = vmax.f32 %v272, 0.0
    %v474 = vmax.f32 %v359, 0.0
    %v475 = vmax.f32 %v361, 0.0
    %v476 = vmax.f32 %v448, 0.0
    %v477 = vmax.f32 %v450, 0.0
    %v478 = vmax.f32 %v187, 0.0
    %v479 = vmax.f32 %v189, 0.0
    %v480 = vmax.f32 %v276, 0.0
    %v481 = vmax.f32 %v278, 0.0
    %v482 = vmax.f32 %v365, 0.0
    %v483 = vmax.f32 %v367, 0.0
    %v484 = vmax.f32 %v454, 0.0
    %v485 = vmax.f32 %v456, 0.0
    %v486 = vmax.f32 %v193, 0.0
    %v487 = vmax.f32 %v195, 0.0
    %v488 = vmax.f32 %v282, 0.0
    %v489 = vmax.f32 %v284, 0.0
    %v490 = vmax.f32 %v371, 0.0
    %v491 = vmax.f32 %v373, 0.0
    %v492 = vmax.f32 %v460, 0.0
    %v493 = vmax.f32 %v462, 0.0
    %v494 = vmax.f32 %v199, 0.0
    %v495 = vmax.f32 %v201, 0.0
    %v496 = vmax.f32 %v288, 0.0
    %v497 = vmax.f32 %v290, 0.0
    %v498 = vmax.f32 %v377, 0.0
    %v499 = vmax.f32 %v379, 0.0
    %v500 = vmax.f32 %v466, 0.0
    %v501 = vmax.f32 %v468, 0.0
    %v502 = vadd.f32 %v470, %v471
    %v503 = vadd.f32 %v478, %v479
    %v504 = vadd.f32 %v486, %v487
    %v505 = vadd.f32 %v494, %v495
    %v506 = vadd.f32 %v472, %v473
    %v507 = vadd.f32 %v480, %v481
    %v508 = vadd.f32 %v488, %v489
    %v509 = vadd.f32 %v496, %v497
    %v510 = vadd.f32 %v474, %v475
    %v511 = vadd.f32 %v482, %v483
    %v512 = vadd.f32 %v490, %v491
    %v513 = vadd.f32 %v498, %v499
    %v514 = vadd.f32 %v476, %v477
    %v515 = vadd.f32 %v484, %v485
    %v516 = vadd.f32 %v492, %v493
    %v517 = vadd.f32 %v500, %v501
    %v518 = vadd.f32 %v502, %v506
    %v519 = vadd.f32 %v503, %v507
    %v520 = vadd.f32 %v504, %v508
    %v521 = vadd.f32 %v505, %v509
    %v522 = vadd.f32 %v510, %v514
    %v523 = vadd.f32 %v511, %v515
    %v524 = vadd.f32 %v512, %v516
    %v525 = vadd.f32 %v513, %v517
    %v526 = vadd.f32 %v518, %v522
    %v527 = vadd.f32 %v519, %v523
    %v528 = vadd.f32 %v520, %v524
    %v529 = vadd.f32 %v521, %v525
    %v530 = vld [vmem:[#allocation2] sm:$0xff]
    %v531 = vld [vmem:[#allocation2 + $0x8] sm:$0xff]
    %v532 = vld [vmem:[#allocation2 + $0x10] sm:$0xff]
    %v533 = vld [vmem:[#allocation2 + $0x18] sm:$0xff]
    %v534 = vadd.f32 %v530, %v526
    %v535 = vadd.f32 %v531, %v527
    %v536 = vadd.f32 %v532, %v528
    %v537 = vadd.f32 %v533, %v529
    %538 = vst [vmem:[#allocation2] sm:$0xff] %v534
    %539 = vst [vmem:[#allocation2 + $0x8] sm:$0xff] %v535
    %540 = vst [vmem:[#allocation2 + $0x10] sm:$0xff] %v536
    %541 = vst [vmem:[#allocation2 + $0x18] sm:$0xff] %v537
    %s542 = scalar_lea.vmem %s0, 8
    %v543 = vld [vmem:[%s542] sm:$0xff]
    %v544 = vunpack.c.0.s8 %v543
    %v545 = vunpack.c.1.s8 %v543
    %v546 = vunpack.c.2.s8 %v543
    %v547 = vunpack.c.3.s8 %v543
    %v548 = vand.u32 %v544, 255
    %v549 = vand.u32 %v545, 255
    %v550 = vand.u32 %v546, 255
    %v551 = vand.u32 %v547, 255
    %v552 = vcvt.s32.f32 %v548
    %v553 = vcvt.s32.f32 %v549
    %v554 = vcvt.s32.f32 %v550
    %v555 = vcvt.s32.f32 %v551
    %v560 = vcombine.high %v552, %v552
    %v561 = vcombine.high %v553, %v553
    %v562 = vcombine.high %v554, %v554
    %v563 = vcombine.high %v555, %v555
    %v564 = vsel %vm97, %v552, 0
    %v566 = vsel %vm97, %v560, 0
    %v568 = vsel %vm97, %v553, 0
    %v570 = vsel %vm97, %v561, 0
    %v572 = vsel %vm97, %v554, 0
    %v574 = vsel %vm97, %v562, 0
    %v576 = vsel %vm97, %v555, 0
    %v578 = vsel %vm97, %v563, 0
    %580 = vmatprep.subr.mxu0 %v566
    %581 = vmatpush1.msra.mxu0 %v564
    %582 = vmatprep.subr.mxu0 0.0
    %583 = vmatpush1.msra.mxu0 0.0
    %584 = vmatprep.subr.mxu0 0.0
    %585 = vmatpush1.msra.mxu0 0.0
    %586 = vmatprep.subr.mxu0 0.0
    %587 = vmatpush1.msra.mxu0 0.0
    %588 = vmatprep.subr.mxu0 0.0
    %589 = vmatpush1.msra.mxu0 0.0
    %590 = vmatprep.subr.mxu0 0.0
    %591 = vmatpush1.msra.mxu0 0.0
    %592 = vmatprep.subr.mxu0 0.0
    %593 = vmatpush1.msra.mxu0 0.0
    %594 = vmatprep.subr.mxu0 0.0
    %595 = vmatpush1.msra.mxu0 0.0
    %596 = vmatprep.subr.mxu0 0.0
    %597 = vmatpush1.msra.mxu0 0.0
    %598 = vmatprep.subr.mxu0 0.0
    %599 = vmatpush1.msra.mxu0 0.0
    %600 = vmatprep.subr.mxu0 0.0
    %601 = vmatpush1.msra.mxu0 0.0
    %602 = vmatprep.subr.mxu0 0.0
    %603 = vmatpush1.msra.mxu0 0.0
    %604 = vmatprep.subr.mxu0 0.0
    %605 = vmatpush1.msra.mxu0 0.0
    %606 = vmatprep.subr.mxu0 0.0
    %607 = vmatpush1.msra.mxu0 0.0
    %608 = vmatprep.subr.mxu0 0.0
    %609 = vmatpush1.msra.mxu0 0.0
    %610 = vmatprep.subr.mxu0 0.0
    %611 = vmatpush1.msra.mxu0 0.0
    %612 = vmatprep.subr.mxu0 0.0
    %613 = vmatpush1.msra.mxu0 0.0
    %614 = vmatprep.subr.mxu0 0.0
    %615 = vmatpush1.msra.mxu0 0.0
    %616 = vmatprep.subr.mxu0 0.0
    %617 = vmatpush1.msra.mxu0 0.0
    %618 = vmatprep.subr.mxu0 0.0
    %619 = vmatpush1.msra.mxu0 0.0
    %620 = vmatprep.subr.mxu0 0.0
    %621 = vmatpush1.msra.mxu0 0.0
    %622 = vmatprep.subr.mxu0 0.0
    %623 = vmatpush1.msra.mxu0 0.0
    %624 = vmatprep.subr.mxu0 0.0
    %625 = vmatpush1.msra.mxu0 0.0
    %626 = vmatprep.subr.mxu0 0.0
    %627 = vmatpush1.msra.mxu0 0.0
    %628 = vmatprep.subr.mxu0 0.0
    %629 = vmatpush1.msra.mxu0 0.0
    %630 = vmatprep.subr.mxu0 0.0
    %631 = vmatpush1.msra.mxu0 0.0
    %632 = vmatprep.subr.mxu0 0.0
    %633 = vmatpush1.msra.mxu0 0.0
    %634 = vmatprep.subr.mxu0 0.0
    %635 = vmatpush1.msra.mxu0 0.0
    %636 = vmatprep.subr.mxu0 0.0
    %637 = vmatpush1.msra.mxu0 0.0
    %638 = vmatprep.subr.mxu0 0.0
    %639 = vmatpush1.msra.mxu0 0.0
    %640 = vmatprep.subr.mxu0 0.0
    %641 = vmatpush1.msra.mxu0 0.0
    %642 = vmatprep.subr.mxu0 0.0
    %643 = vmatpush1.msra.mxu0 0.0
    %644 = vmatprep.mubr.f32.mxu0 0.0
    %645 = vmatmul.mubr.f32.gmra.mrb[0].mxu0 %v86
    %v646 = vpop.f32.mrb[0].mxu0
    %v647 = vadd.f32 %v59, %v646
    %v648 = vpop.f32.mrb[0].mxu0
    %v649 = vadd.f32 %v59, %v648
    %650 = vmatprep.mubr.f32.mxu0 0.0
    %651 = vmatmul.mubr.f32.gmra.mrb[0].mxu0 %v89
    %v652 = vpop.f32.mrb[0].mxu0
    %v653 = vadd.f32 %v64, %v652
    %v654 = vpop.f32.mrb[0].mxu0
    %v655 = vadd.f32 %v64, %v654
    %656 = vmatprep.mubr.f32.mxu0 0.0
    %657 = vmatmul.mubr.f32.gmra.mrb[0].mxu0 %v92
    %v658 = vpop.f32.mrb[0].mxu0
    %v659 = vadd.f32 %v69, %v658
    %v660 = vpop.f32.mrb[0].mxu0
    %v661 = vadd.f32 %v69, %v660
    %662 = vmatprep.mubr.f32.mxu0 0.0
    %663 = vmatmul.mubr.f32.gmra.mrb[0].mxu0 %v95
    %v664 = vpop.f32.mrb[0].mxu0
    %v665 = vadd.f32 %v74, %v664
    %v666 = vpop.f32.mrb[0].mxu0
    %v667 = vadd.f32 %v74, %v666
    %668 = vdwg.mxu0
    %669 = vmatprep.subr.mxu0 %v570
    %670 = vmatpush1.msra.mxu0 %v568
    %671 = vmatprep.subr.mxu0 0.0
    %672 = vmatpush1.msra.mxu0 0.0
    %673 = vmatprep.subr.mxu0 0.0
    %674 = vmatpush1.msra.mxu0 0.0
    %675 = vmatprep.subr.mxu0 0.0
    %676 = vmatpush1.msra.mxu0 0.0
    %677 = vmatprep.subr.mxu0 0.0
    %678 = vmatpush1.msra.mxu0 0.0
    %679 = vmatprep.subr.mxu0 0.0
    %680 = vmatpush1.msra.mxu0 0.0
    %681 = vmatprep.subr.mxu0 0.0
    %682 = vmatpush1.msra.mxu0 0.0
    %683 = vmatprep.subr.mxu0 0.0
    %684 = vmatpush1.msra.mxu0 0.0
    %685 = vmatprep.subr.mxu0 0.0
    %686 = vmatpush1.msra.mxu0 0.0
    %687 = vmatprep.subr.mxu0 0.0
    %688 = vmatpush1.msra.mxu0 0.0
    %689 = vmatprep.subr.mxu0 0.0
    %690 = vmatpush1.msra.mxu0 0.0
    %691 = vmatprep.subr.mxu0 0.0
    %692 = vmatpush1.msra.mxu0 0.0
    %693 = vmatprep.subr.mxu0 0.0
    %694 = vmatpush1.msra.mxu0 0.0
    %695 = vmatprep.subr.mxu0 0.0
    %696 = vmatpush1.msra.mxu0 0.0
    %697 = vmatprep.subr.mxu0 0.0
    %698 = vmatpush1.msra.mxu0 0.0
    %699 = vmatprep.subr.mxu0 0.0
    %700 = vmatpush1.msra.mxu0 0.0
    %701 = vmatprep.subr.mxu0 0.0
    %702 = vmatpush1.msra.mxu0 0.0
    %703 = vmatprep.subr.mxu0 0.0
    %704 = vmatpush1.msra.mxu0 0.0
    %705 = vmatprep.subr.mxu0 0.0
    %706 = vmatpush1.msra.mxu0 0.0
    %707 = vmatprep.subr.mxu0 0.0
    %708 = vmatpush1.msra.mxu0 0.0
    %709 = vmatprep.subr.mxu0 0.0
    %710 = vmatpush1.msra.mxu0 0.0
    %711 = vmatprep.subr.mxu0 0.0
    %712 = vmatpush1.msra.mxu0 0.0
    %713 = vmatprep.subr.mxu0 0.0
    %714 = vmatpush1.msra.mxu0 0.0
    %715 = vmatprep.subr.mxu0 0.0
    %716 = vmatpush1.msra.mxu0 0.0
    %717 = vmatprep.subr.mxu0 0.0
    %718 = vmatpush1.msra.mxu0 0.0
    %719 = vmatprep.subr.mxu0 0.0
    %720 = vmatpush1.msra.mxu0 0.0
    %721 = vmatprep.subr.mxu0 0.0
    %722 = vmatpush1.msra.mxu0 0.0
    %723 = vmatprep.subr.mxu0 0.0
    %724 = vmatpush1.msra.mxu0 0.0
    %725 = vmatprep.subr.mxu0 0.0
    %726 = vmatpush1.msra.mxu0 0.0
    %727 = vmatprep.subr.mxu0 0.0
    %728 = vmatpush1.msra.mxu0 0.0
    %729 = vmatprep.subr.mxu0 0.0
    %730 = vmatpush1.msra.mxu0 0.0
    %731 = vmatprep.subr.mxu0 0.0
    %732 = vmatpush1.msra.mxu0 0.0
    %733 = vmatprep.mubr.f32.mxu0 0.0
    %734 = vmatmul.mubr.f32.gmra.mrb[0].mxu0 %v86
    %v735 = vpop.f32.mrb[0].mxu0
    %v736 = vadd.f32 %v59, %v735
    %v737 = vpop.f32.mrb[0].mxu0
    %v738 = vadd.f32 %v59, %v737
    %739 = vmatprep.mubr.f32.mxu0 0.0
    %740 = vmatmul.mubr.f32.gmra.mrb[0].mxu0 %v89
    %v741 = vpop.f32.mrb[0].mxu0
    %v742 = vadd.f32 %v64, %v741
    %v743 = vpop.f32.mrb[0].mxu0
    %v744 = vadd.f32 %v64, %v743
    %745 = vmatprep.mubr.f32.mxu0 0.0
    %746 = vmatmul.mubr.f32.gmra.mrb[0].mxu0 %v92
    %v747 = vpop.f32.mrb[0].mxu0
    %v748 = vadd.f32 %v69, %v747
    %v749 = vpop.f32.mrb[0].mxu0
    %v750 = vadd.f32 %v69, %v749
    %751 = vmatprep.mubr.f32.mxu0 0.0
    %752 = vmatmul.mubr.f32.gmra.mrb[0].mxu0 %v95
    %v753 = vpop.f32.mrb[0].mxu0
    %v754 = vadd.f32 %v74, %v753
    %v755 = vpop.f32.mrb[0].mxu0
    %v756 = vadd.f32 %v74, %v755
    %757 = vdwg.mxu0
    %758 = vmatprep.subr.mxu0 %v574
    %759 = vmatpush1.msra.mxu0 %v572
    %760 = vmatprep.subr.mxu0 0.0
    %761 = vmatpush1.msra.mxu0 0.0
    %762 = vmatprep.subr.mxu0 0.0
    %763 = vmatpush1.msra.mxu0 0.0
    %764 = vmatprep.subr.mxu0 0.0
    %765 = vmatpush1.msra.mxu0 0.0
    %766 = vmatprep.subr.mxu0 0.0
    %767 = vmatpush1.msra.mxu0 0.0
    %768 = vmatprep.subr.mxu0 0.0
    %769 = vmatpush1.msra.mxu0 0.0
    %770 = vmatprep.subr.mxu0 0.0
    %771 = vmatpush1.msra.mxu0 0.0
    %772 = vmatprep.subr.mxu0 0.0
    %773 = vmatpush1.msra.mxu0 0.0
    %774 = vmatprep.subr.mxu0 0.0
    %775 = vmatpush1.msra.mxu0 0.0
    %776 = vmatprep.subr.mxu0 0.0
    %777 = vmatpush1.msra.mxu0 0.0
    %778 = vmatprep.subr.mxu0 0.0
    %779 = vmatpush1.msra.mxu0 0.0
    %780 = vmatprep.subr.mxu0 0.0
    %781 = vmatpush1.msra.mxu0 0.0
    %782 = vmatprep.subr.mxu0 0.0
    %783 = vmatpush1.msra.mxu0 0.0
    %784 = vmatprep.subr.mxu0 0.0
    %785 = vmatpush1.msra.mxu0 0.0
    %786 = vmatprep.subr.mxu0 0.0
    %787 = vmatpush1.msra.mxu0 0.0
    %788 = vmatprep.subr.mxu0 0.0
    %789 = vmatpush1.msra.mxu0 0.0
    %790 = vmatprep.subr.mxu0 0.0
    %791 = vmatpush1.msra.mxu0 0.0
    %792 = vmatprep.subr.mxu0 0.0
    %793 = vmatpush1.msra.mxu0 0.0
    %794 = vmatprep.subr.mxu0 0.0
    %795 = vmatpush1.msra.mxu0 0.0
    %796 = vmatprep.subr.mxu0 0.0
    %797 = vmatpush1.msra.mxu0 0.0
    %798 = vmatprep.subr.mxu0 0.0
    %799 = vmatpush1.msra.mxu0 0.0
    %800 = vmatprep.subr.mxu0 0.0
    %801 = vmatpush1.msra.mxu0 0.0
    %802 = vmatprep.subr.mxu0 0.0
    %803 = vmatpush1.msra.mxu0 0.0
    %804 = vmatprep.subr.mxu0 0.0
    %805 = vmatpush1.msra.mxu0 0.0
    %806 = vmatprep.subr.mxu0 0.0
    %807 = vmatpush1.msra.mxu0 0.0
    %808 = vmatprep.subr.mxu0 0.0
    %809 = vmatpush1.msra.mxu0 0.0
    %810 = vmatprep.subr.mxu0 0.0
    %811 = vmatpush1.msra.mxu0 0.0
    %812 = vmatprep.subr.mxu0 0.0
    %813 = vmatpush1.msra.mxu0 0.0
    %814 = vmatprep.subr.mxu0 0.0
    %815 = vmatpush1.msra.mxu0 0.0
    %816 = vmatprep.subr.mxu0 0.0
    %817 = vmatpush1.msra.mxu0 0.0
    %818 = vmatprep.subr.mxu0 0.0
    %819 = vmatpush1.msra.mxu0 0.0
    %820 = vmatprep.subr.mxu0 0.0
    %821 = vmatpush1.msra.mxu0 0.0
    %822 = vmatprep.mubr.f32.mxu0 0.0
    %823 = vmatmul.mubr.f32.gmra.mrb[0].mxu0 %v86
    %v824 = vpop.f32.mrb[0].mxu0
    %v825 = vadd.f32 %v59, %v824
    %v826 = vpop.f32.mrb[0].mxu0
    %v827 = vadd.f32 %v59, %v826
    %828 = vmatprep.mubr.f32.mxu0 0.0
    %829 = vmatmul.mubr.f32.gmra.mrb[0].mxu0 %v89
    %v830 = vpop.f32.mrb[0].mxu0
    %v831 = vadd.f32 %v64, %v830
    %v832 = vpop.f32.mrb[0].mxu0
    %v833 = vadd.f32 %v64, %v832
    %834 = vmatprep.mubr.f32.mxu0 0.0
    %835 = vmatmul.mubr.f32.gmra.mrb[0].mxu0 %v92
    %v836 = vpop.f32.mrb[0].mxu0
    %v837 = vadd.f32 %v69, %v836
    %v838 = vpop.f32.mrb[0].mxu0
    %v839 = vadd.f32 %v69, %v838
    %840 = vmatprep.mubr.f32.mxu0 0.0
    %841 = vmatmul.mubr.f32.gmra.mrb[0].mxu0 %v95
    %v842 = vpop.f32.mrb[0].mxu0
    %v843 = vadd.f32 %v74, %v842
    %v844 = vpop.f32.mrb[0].mxu0
    %v845 = vadd.f32 %v74, %v844
    %846 = vdwg.mxu0
    %847 = vmatprep.subr.mxu0 %v578
    %848 = vmatpush1.msra.mxu0 %v576
    %849 = vmatprep.subr.mxu0 0.0
    %850 = vmatpush1.msra.mxu0 0.0
    %851 = vmatprep.subr.mxu0 0.0
    %852 = vmatpush1.msra.mxu0 0.0
    %853 = vmatprep.subr.mxu0 0.0
    %854 = vmatpush1.msra.mxu0 0.0
    %855 = vmatprep.subr.mxu0 0.0
    %856 = vmatpush1.msra.mxu0 0.0
    %857 = vmatprep.subr.mxu0 0.0
    %858 = vmatpush1.msra.mxu0 0.0
    %859 = vmatprep.subr.mxu0 0.0
    %860 = vmatpush1.msra.mxu0 0.0
    %861 = vmatprep.subr.mxu0 0.0
    %862 = vmatpush1.msra.mxu0 0.0
    %863 = vmatprep.subr.mxu0 0.0
    %864 = vmatpush1.msra.mxu0 0.0
    %865 = vmatprep.subr.mxu0 0.0
    %866 = vmatpush1.msra.mxu0 0.0
    %867 = vmatprep.subr.mxu0 0.0
    %868 = vmatpush1.msra.mxu0 0.0
    %869 = vmatprep.subr.mxu0 0.0
    %870 = vmatpush1.msra.mxu0 0.0
    %871 = vmatprep.subr.mxu0 0.0
    %872 = vmatpush1.msra.mxu0 0.0
    %873 = vmatprep.subr.mxu0 0.0
    %874 = vmatpush1.msra.mxu0 0.0
    %875 = vmatprep.subr.mxu0 0.0
    %876 = vmatpush1.msra.mxu0 0.0
    %877 = vmatprep.subr.mxu0 0.0
    %878 = vmatpush1.msra.mxu0 0.0
    %879 = vmatprep.subr.mxu0 0.0
    %880 = vmatpush1.msra.mxu0 0.0
    %881 = vmatprep.subr.mxu0 0.0
    %882 = vmatpush1.msra.mxu0 0.0
    %883 = vmatprep.subr.mxu0 0.0
    %884 = vmatpush1.msra.mxu0 0.0
    %885 = vmatprep.subr.mxu0 0.0
    %886 = vmatpush1.msra.mxu0 0.0
    %887 = vmatprep.subr.mxu0 0.0
    %888 = vmatpush1.msra.mxu0 0.0
    %889 = vmatprep.subr.mxu0 0.0
    %890 = vmatpush1.msra.mxu0 0.0
    %891 = vmatprep.subr.mxu0 0.0
    %892 = vmatpush1.msra.mxu0 0.0
    %893 = vmatprep.subr.mxu0 0.0
    %894 = vmatpush1.msra.mxu0 0.0
    %895 = vmatprep.subr.mxu0 0.0
    %896 = vmatpush1.msra.mxu0 0.0
    %897 = vmatprep.subr.mxu0 0.0
    %898 = vmatpush1.msra.mxu0 0.0
    %899 = vmatprep.subr.mxu0 0.0
    %900 = vmatpush1.msra.mxu0 0.0
    %901 = vmatprep.subr.mxu0 0.0
    %902 = vmatpush1.msra.mxu0 0.0
    %903 = vmatprep.subr.mxu0 0.0
    %904 = vmatpush1.msra.mxu0 0.0
    %905 = vmatprep.subr.mxu0 0.0
    %906 = vmatpush1.msra.mxu0 0.0
    %907 = vmatprep.subr.mxu0 0.0
    %908 = vmatpush1.msra.mxu0 0.0
    %909 = vmatprep.subr.mxu0 0.0
    %910 = vmatpush1.msra.mxu0 0.0
    %911 = vmatprep.mubr.f32.mxu0 0.0
    %912 = vmatmul.mubr.f32.gmra.mrb[0].mxu0 %v86
    %v913 = vpop.f32.mrb[0].mxu0
    %v914 = vadd.f32 %v59, %v913
    %v915 = vpop.f32.mrb[0].mxu0
    %v916 = vadd.f32 %v59, %v915
    %917 = vmatprep.mubr.f32.mxu0 0.0
    %918 = vmatmul.mubr.f32.gmra.mrb[0].mxu0 %v89
    %v919 = vpop.f32.mrb[0].mxu0
    %v920 = vadd.f32 %v64, %v919
    %v921 = vpop.f32.mrb[0].mxu0
    %v922 = vadd.f32 %v64, %v921
    %923 = vmatprep.mubr.f32.mxu0 0.0
    %924 = vmatmul.mubr.f32.gmra.mrb[0].mxu0 %v92
    %v925 = vpop.f32.mrb[0].mxu0
    %v926 = vadd.f32 %v69, %v925
    %v927 = vpop.f32.mrb[0].mxu0
    %v928 = vadd.f32 %v69, %v927
    %929 = vmatprep.mubr.f32.mxu0 0.0
    %930 = vmatmul.mubr.f32.gmra.mrb[0].mxu0 %v95
    %v931 = vpop.f32.mrb[0].mxu0
    %v932 = vadd.f32 %v74, %v931
    %v933 = vpop.f32.mrb[0].mxu0
    %v934 = vadd.f32 %v74, %v933
    %935 = vdwg.mxu0
    %v936 = vmax.f32 %v647, 0.0
    %v937 = vmax.f32 %v649, 0.0
    %v938 = vmax.f32 %v736, 0.0
    %v939 = vmax.f32 %v738, 0.0
    %v940 = vmax.f32 %v825, 0.0
    %v941 = vmax.f32 %v827, 0.0
    %v942 = vmax.f32 %v914, 0.0
    %v943 = vmax.f32 %v916, 0.0
    %v944 = vmax.f32 %v653, 0.0
    %v945 = vmax.f32 %v655, 0.0
    %v946 = vmax.f32 %v742, 0.0
    %v947 = vmax.f32 %v744, 0.0
    %v948 = vmax.f32 %v831, 0.0
    %v949 = vmax.f32 %v833, 0.0
    %v950 = vmax.f32 %v920, 0.0
    %v951 = vmax.f32 %v922, 0.0
    %v952 = vmax.f32 %v659, 0.0
    %v953 = vmax.f32 %v661, 0.0
    %v954 = vmax.f32 %v748, 0.0
    %v955 = vmax.f32 %v750, 0.0
    %v956 = vmax.f32 %v837, 0.0
    %v957 = vmax.f32 %v839, 0.0
    %v958 = vmax.f32 %v926, 0.0
    %v959 = vmax.f32 %v928, 0.0
    %v960 = vmax.f32 %v665, 0.0
    %v961 = vmax.f32 %v667, 0.0
    %v962 = vmax.f32 %v754, 0.0
    %v963 = vmax.f32 %v756, 0.0
    %v964 = vmax.f32 %v843, 0.0
    %v965 = vmax.f32 %v845, 0.0
    %v966 = vmax.f32 %v932, 0.0
    %v967 = vmax.f32 %v934, 0.0
    %v968 = vadd.f32 %v936, %v937
    %v969 = vadd.f32 %v944, %v945
    %v970 = vadd.f32 %v952, %v953
    %v971 = vadd.f32 %v960, %v961
    %v972 = vadd.f32 %v938, %v939
    %v973 = vadd.f32 %v946, %v947
    %v974 = vadd.f32 %v954, %v955
    %v975 = vadd.f32 %v962, %v963
    %v976 = vadd.f32 %v940, %v941
    %v977 = vadd.f32 %v948, %v949
    %v978 = vadd.f32 %v956, %v957
    %v979 = vadd.f32 %v964, %v965
    %v980 = vadd.f32 %v942, %v943
    %v981 = vadd.f32 %v950, %v951
    %v982 = vadd.f32 %v958, %v959
    %v983 = vadd.f32 %v966, %v967
    %v984 = vadd.f32 %v968, %v972
    %v985 = vadd.f32 %v969, %v973
    %v986 = vadd.f32 %v970, %v974
    %v987 = vadd.f32 %v971, %v975
    %v988 = vadd.f32 %v976, %v980
    %v989 = vadd.f32 %v977, %v981
    %v990 = vadd.f32 %v978, %v982
    %v991 = vadd.f32 %v979, %v983
    %v992 = vadd.f32 %v984, %v988
    %v993 = vadd.f32 %v985, %v989
    %v994 = vadd.f32 %v986, %v990
    %v995 = vadd.f32 %v987, %v991
    %s996 = scalar_lea.vmem [#allocation2], 32
    %v997 = vld [vmem:[%s996] sm:$0xff]
    %v998 = vld [vmem:[%s996 + $0x8] sm:$0xff]
    %v999 = vld [vmem:[%s996 + $0x10] sm:$0xff]
    %v1000 = vld [vmem:[%s996 + $0x18] sm:$0xff]
    %v1001 = vadd.f32 %v997, %v992
    %v1002 = vadd.f32 %v998, %v993
    %v1003 = vadd.f32 %v999, %v994
    %v1004 = vadd.f32 %v1000, %v995
    %1005 = vst [vmem:[%s996] sm:$0xff] %v1001
    %1006 = vst [vmem:[%s996 + $0x8] sm:$0xff] %v1002
    %1007 = vst [vmem:[%s996 + $0x10] sm:$0xff] %v1003
    %1008 = vst [vmem:[%s996 + $0x18] sm:$0xff] %v1004
    // Predicated region
    $region26: #{tpu_custom_call.1} parent=1 // pred_check
      %p1009 = pneg %p23
    $region27: #{tpu_custom_call.1} parent=1 // pred_check_branch
      %1011 = sbr.rel (%p1009) target = $region29
    $region28: #{tpu_custom_call.1} parent=1 // pred_region
      %v1012 = vld [vmem:[%s3] sm:$0xff]
      %v1013 = vld [vmem:[%s3 + $0x8] sm:$0xff]
      %v1014 = vld [vmem:[%s3 + $0x10] sm:$0xff]
      %v1015 = vld [vmem:[%s3 + $0x18] sm:$0xff]
      %v1016 = vld [vmem:[#allocation3] sm:$0x1]
      %v1017 = vld [vmem:[#allocation2] sm:$0xff]
      %v1018 = vld [vmem:[#allocation2 + $0x8] sm:$0xff]
      %v1019 = vld [vmem:[#allocation2 + $0x10] sm:$0xff]
      %v1020 = vld [vmem:[#allocation2 + $0x18] sm:$0xff]
      %1021 = vadd.xlane.f32.xlu0 %v1017
      %v1022 = vpop.xlane.xlu0 %1021
      %1023 = vadd.xlane.f32.xlu0 %v1018
      %v1024 = vpop.xlane.xlu0 %1023
      %1025 = vadd.xlane.f32.xlu0 %v1019
      %v1026 = vpop.xlane.xlu0 %1025
      %1027 = vadd.xlane.f32.xlu0 %v1020
      %v1028 = vpop.xlane.xlu0 %1027
      %v1029 = vmul.f32 %v1022, %v1012
      %v1030 = vmul.f32 %v1024, %v1013
      %v1031 = vmul.f32 %v1026, %v1014
      %v1032 = vmul.f32 %v1028, %v1015
      %vm1033 = vcmask 7168
      %v1034 = vsel %vm1033, %v1029, 0.0
      %v1035 = vsel %vm1033, %v1030, 0.0
      %v1036 = vadd.f32 %v1034, %v1035
      %v1037 = vsel %vm1033, %v1031, 0.0
      %v1038 = vadd.f32 %v1036, %v1037
      %v1039 = vsel %vm1033, %v1032, 0.0
      %v1040 = vadd.f32 %v1038, %v1039
      %v1041 = vrot.slane %v1040, 4
      %v1042 = vadd.f32 %v1040, %v1041
      %v1043 = vrot.slane %v1042, 2
      %v1044 = vadd.f32 %v1042, %v1043
      %v1045 = vrot.slane %v1044, 1
      %v1046 = vadd.f32 %v1044, %v1045
      %v1047 = vadd.f32 %v1046, %v1016
      %vm1048 = vcmp.gt.f32.partialorder %v1047, 0.0
      %v1049 = vsel %vm1048, 1, 0
      %v1050 = vcvt.s32.f32 %v1049
      %1052 = vset.pattern.permute.xlu0 0
      %1053 = vperm.xlu0 %1052, %v1050
      %v1054 = vpop.permute.xlu0 %1053
      %1056 = vst [vmem:[#allocation4] sm:$0x1] %v1054
      %v1057 = vld [vmem:[%s996] sm:$0xff]
      %v1058 = vld [vmem:[%s996 + $0x8] sm:$0xff]
      %v1059 = vld [vmem:[%s996 + $0x10] sm:$0xff]
      %v1060 = vld [vmem:[%s996 + $0x18] sm:$0xff]
      %1061 = vadd.xlane.f32.xlu0 %v1057
      %v1062 = vpop.xlane.xlu0 %1061
      %1063 = vadd.xlane.f32.xlu0 %v1058
      %v1064 = vpop.xlane.xlu0 %1063
      %1065 = vadd.xlane.f32.xlu0 %v1059
      %v1066 = vpop.xlane.xlu0 %1065
      %1067 = vadd.xlane.f32.xlu0 %v1060
      %v1068 = vpop.xlane.xlu0 %1067
      %v1069 = vmul.f32 %v1062, %v1012
      %v1070 = vmul.f32 %v1064, %v1013
      %v1071 = vmul.f32 %v1066, %v1014
      %v1072 = vmul.f32 %v1068, %v1015
      %v1073 = vsel %vm1033, %v1069, 0.0
      %v1074 = vsel %vm1033, %v1070, 0.0
      %v1075 = vadd.f32 %v1073, %v1074
      %v1076 = vsel %vm1033, %v1071, 0.0
      %v1077 = vadd.f32 %v1075, %v1076
      %v1078 = vsel %vm1033, %v1072, 0.0
      %v1079 = vadd.f32 %v1077, %v1078
      %v1080 = vrot.slane %v1079, 4
      %v1081 = vadd.f32 %v1079, %v1080
      %v1082 = vrot.slane %v1081, 2
      %v1083 = vadd.f32 %v1081, %v1082
      %v1084 = vrot.slane %v1083, 1
      %v1085 = vadd.f32 %v1083, %v1084
      %v1086 = vadd.f32 %v1085, %v1016
      %vm1087 = vcmp.gt.f32.partialorder %v1086, 0.0
      %v1088 = vsel %vm1087, 1, 0
      %v1089 = vcvt.s32.f32 %v1088
      %1091 = vset.pattern.permute.xlu0 0
      %1092 = vperm.xlu0 %1091, %v1089
      %v1093 = vpop.permute.xlu0 %1092
      %s1095 = scalar_lea.vmem [#allocation4], 1
      %1096 = vst [vmem:[%s1095] sm:$0x1] %v1093
    $region29: #{tpu_custom_call.1} parent=1 // pred_fallthru
      _
    // Predicated region
    $region30: #{tpu_custom_call.1} parent=1 // pred_check
      _
    $region31: #{tpu_custom_call.1} parent=1 // pred_check_branch
      %1098 = sbr.rel (0) target = $region33
    $region32: #{tpu_custom_call.1} parent=1 // pred_region
      %s1100 = ssub.s32 32, 32
      %1101 = vsyncadd [#allocation5], %s1100
      %s1102 = sshll.u32 [#allocation4], 4
      %s1103 = int_to_ptr.vmem [resolvable:$true] %s1102
      %1108 = dma.vmem_to_hbm [thread:$0]  %s1103, 32, %s5, [#allocation5], 16, 16, 1
    $region33: #{tpu_custom_call.1} parent=1 // pred_fallthru
      _
    // Predicated region
    $region34: #{tpu_custom_call.1} parent=1 // pred_check
      _
    $region35: #{tpu_custom_call.1} parent=1 // pred_check_branch
      %1110 = sbr.rel (0) target = $region37
    $region36: #{tpu_custom_call.1} parent=1 // pred_region
      %1111 = dma.done [#allocation5], 32
    $region37: #{tpu_custom_call.1} parent=1 // pred_fallthru
      _
    %1112 = vsyncpa [#allocation5], 1

</llo_original>
